<compile_context>
chip_gen: v7x
topology: tpu7x:2x2x1
jax: 0.10.0
libtpu: 0.0.40
codegen_flags: <defaults>
</compile_context>

<pallas_src>
import jax
import jax.numpy as jnp
from jax.experimental import pallas as pl
from jax.experimental.pallas import tpu as pltpu

LANE = 128
SUBLANE = 8
TARGET_BLOCK_BYTES = 1 << 20  # ~1 MiB per block


def _choose_width(n):
    """Widest lane-dense last dim (multiple of 128) dividing n, preferring >=8 rows."""
    fallback = None
    for w in (2048, 1024, 512, 256, 128):
        if n % w == 0:
            if n // w >= SUBLANE:
                return w
            if fallback is None:
                fallback = w
    return fallback  # None => n is not a multiple of 128 (rare pad path)


def _make_elementwise_kernel(func):
    def kernel(x_ref, o_ref):
        o_ref[...] = func(x_ref[...])
    return kernel


def make_torch_net(func, transcendentals_per_elem=0):
    """Equivalent of torchNet(func): forward(x) == func(x) (elementwise)."""
    kernel = _make_elementwise_kernel(func)

    @jax.jit
    def forward(x):
        orig_shape = x.shape
        dtype = x.dtype
        n = x.size
        itemsize = jnp.dtype(dtype).itemsize

        flat = jnp.ravel(x)
        width = _choose_width(n)
        pad = 0
        if width is None:
            # TODO(synk): ragged lane count (n % 128 != 0) costs one extra copy
            # outside the kernel; never triggers for the benchmark shape.
            width = LANE
            pad = (-n) % LANE
            flat = jnp.concatenate([flat, jnp.zeros((pad,), dtype=dtype)])
        rows = (n + pad) // width
        x2d = flat.reshape(rows, width)

        # ~1 MiB lane-dense block; sublane-aligned row count.
        block_rows = max(
            SUBLANE,
            (TARGET_BLOCK_BYTES // (width * itemsize)) // SUBLANE * SUBLANE,
        )
        if block_rows >= rows:
            block_rows = rows  # single full-extent block (always legal)
        grid = (pl.cdiv(rows, block_rows),)  # partial last block handled by Pallas

        cost = pl.CostEstimate(
            flops=n,
            transcendentals=transcendentals_per_elem * n,
            bytes_accessed=2 * n * itemsize,
        )

        out2d = pl.pallas_call(
            kernel,
            out_shape=jax.ShapeDtypeStruct((rows, width), dtype),
            grid_spec=pltpu.PrefetchScalarGridSpec(
                num_scalar_prefetch=0,
                grid=grid,
                in_specs=[pl.BlockSpec((block_rows, width), lambda i: (i, 0))],
                out_specs=pl.BlockSpec((block_rows, width), lambda i: (i, 0)),
            ),
            compiler_params=pltpu.CompilerParams(
                dimension_semantics=("parallel",),
            ),
            cost_estimate=cost,
        )(x2d)

        out_flat = out2d.reshape(-1)
        if pad:
            out_flat = out_flat[:n]
        return out_flat.reshape(orig_shape)

    return forward


if __name__ == "__main__":
    # Representative injected func (elementwise), matching torchNet(func) usage.
    func = lambda v: jnp.maximum(v, 0.0)  # e.g. torch.relu

    net = make_torch_net(func)

    key = jax.random.PRNGKey(0)
    # Small shape consistent with the 4-D float32 input of the original script.
    x = jax.random.normal(key, (8, 4, 16, 16), dtype=jnp.float32)

    out = jax.block_until_ready(net(x))
    ref = func(x)
    assert out.shape == x.shape and out.dtype == x.dtype
    assert jnp.allclose(out, ref), "mismatch vs reference (small shape)"

    # Secondary small check exercising the multi-block / partial-last-block path.
    key2 = jax.random.PRNGKey(1)
    x2 = jax.random.normal(key2, (40, 20, 20, 20), dtype=jnp.float32)
    out2 = jax.block_until_ready(net(x2))
    assert jnp.allclose(out2, func(x2)), "mismatch vs reference (partial block)"

    print("KERNEL_OK")
</pallas_src>

<mosaic_0001>
module attributes {stable_mosaic.version = 11 : i64} {
  func.func @kernel(%arg0: i32, %arg1: memref<8x1024xf32, #tpu.memory_space<vmem>>, %arg2: memref<8x1024xf32, #tpu.memory_space<vmem>>) attributes {dimension_semantics = [#tpu.dimension_semantics<parallel>], iteration_bounds = array<i64: 1>, scalar_prefetch = 0 : i64, scratch_operands = 0 : i64, tpu.core_type = #tpu.core_type<tc>, window_params = [{transform_indices = @transform_0, window_bounds = array<i64: 8, 1024>}, {transform_indices = @transform_1, window_bounds = array<i64: 8, 1024>}]} {
    %c0 = arith.constant 0 : index
    %c0_0 = arith.constant 0 : index
    %0 = vector.load %arg1[%c0, %c0_0] : memref<8x1024xf32, #tpu.memory_space<vmem>>, vector<8x1024xf32>
    %cst = arith.constant 0.000000e+00 : f32
    %1 = vector.broadcast %cst : f32 to vector<8x1024xf32>
    %2 = arith.maximumf %0, %1 : vector<8x1024xf32>
    %c0_1 = arith.constant 0 : index
    %c0_2 = arith.constant 0 : index
    %3 = vector.load %arg2[%c0_1, %c0_2] : memref<8x1024xf32, #tpu.memory_space<vmem>>, vector<8x1024xf32>
    tpu.vector_store %arg2[%c0_1, %c0_2], %2 {strides = array<i32>} : memref<8x1024xf32, #tpu.memory_space<vmem>>, vector<8x1024xf32>,
    return
  }
  func.func @transform_0(%arg0: i32) -> (i32, i32) {
    %c0_i32 = arith.constant 0 : i32
    %c0_i32_0 = arith.constant 0 : i32
    return %arg0, %c0_i32 : i32, i32
  }
  func.func @transform_1(%arg0: i32) -> (i32, i32) {
    %c0_i32 = arith.constant 0 : i32
    %c0_i32_0 = arith.constant 0 : i32
    return %arg0, %c0_i32 : i32, i32
  }
}

</mosaic_0001>

<llo_original>
// kernel: forward.1
$region0: #{forward.1}
  #allocation0 [shape = 'u32[]', space=smem, size = 0x4, offset = 0x4, fixed_abs, tag = 'smem constant byte address 0x4 - core index']
  #allocation1 [shape = 'u32[144,128]{1,0:T(1,128)}', space=vmem, size = 0x12000, scoped, tag = 'internal scratch']
  %s0 = inlined_call_operand.vmem [shape: f32[8,1024], index: 0, kind: input, shape index: {}]
  %s1 = inlined_call_operand.vmem [shape: f32[8,1024], index: 1, kind: output, shape index: {}]
  %s2 = sld [smem:[#allocation0]]
  $region14: #{forward.1} parent=0
    _
  %s4 = ssub.s32 1, %s2
  %s5 = scalar_select 0, %s4, %s2
  // Predicated region
  $region2: #{forward.1} parent=0 // pred_check
    _
  $region3: #{forward.1} parent=0 // pred_check_branch
    %7 = sbr.rel (0) target = $region5
  $region4: #{forward.1} parent=0 // pred_region
    _
  $region5: #{forward.1} parent=0 // pred_fallthru
    _
  %v8 = vld [vmem:[%s0] sm:$0xff]
  %v9 = vld [vmem:[%s0 + $0x8] sm:$0xff]
  %v10 = vld [vmem:[%s0 + $0x10] sm:$0xff]
  %v11 = vld [vmem:[%s0 + $0x18] sm:$0xff]
  %v12 = vld [vmem:[%s0 + $0x20] sm:$0xff]
  %v13 = vld [vmem:[%s0 + $0x28] sm:$0xff]
  %v14 = vld [vmem:[%s0 + $0x30] sm:$0xff]
  %v15 = vld [vmem:[%s0 + $0x38] sm:$0xff]
  %v16 = vmax.f32 %v8, 0.0
  %v17 = vmax.f32 %v9, 0.0
  %v18 = vmax.f32 %v10, 0.0
  %v19 = vmax.f32 %v11, 0.0
  %v20 = vmax.f32 %v12, 0.0
  %v21 = vmax.f32 %v13, 0.0
  %v22 = vmax.f32 %v14, 0.0
  %v23 = vmax.f32 %v15, 0.0
  %24 = vst [vmem:[%s1] sm:$0xff] %v16
  %25 = vst [vmem:[%s1 + $0x8] sm:$0xff] %v17
  %26 = vst [vmem:[%s1 + $0x10] sm:$0xff] %v18
  %27 = vst [vmem:[%s1 + $0x18] sm:$0xff] %v19
  %28 = vst [vmem:[%s1 + $0x20] sm:$0xff] %v20
  %29 = vst [vmem:[%s1 + $0x28] sm:$0xff] %v21
  %30 = vst [vmem:[%s1 + $0x30] sm:$0xff] %v22
  %31 = vst [vmem:[%s1 + $0x38] sm:$0xff] %v23
  // Predicated region
  $region6: #{forward.1} parent=0 // pred_check
    _
  $region7: #{forward.1} parent=0 // pred_check_branch
    %33 = sbr.rel (0) target = $region9
  $region8: #{forward.1} parent=0 // pred_region
    _
  $region9: #{forward.1} parent=0 // pred_fallthru
    _
  // Predicated region
  $region10: #{forward.1} parent=0 // pred_check
    _
  $region11: #{forward.1} parent=0 // pred_check_branch
    %35 = sbr.rel (0) target = $region13
  $region12: #{forward.1} parent=0 // pred_region
    _
  $region13: #{forward.1} parent=0 // pred_fallthru
    _

</llo_original>
